<compile_context>
chip_gen: v7x
topology: tpu7x:2x2x1
jax: 0.10.0
libtpu: 0.0.40
codegen_flags: <defaults>
</compile_context>

<pallas_src>
import jax
import jax.numpy as jnp
from jax.experimental import pallas as pl
from jax.experimental.pallas import tpu as pltpu


def _round_up(x: int, m: int) -> int:
    return ((x + m - 1) // m) * m


def _pad2d(a, rows: int, cols: int):
    pr = rows - a.shape[0]
    pc = cols - a.shape[1]
    if pr == 0 and pc == 0:
        return a
    return jnp.pad(a, ((0, pr), (0, pc)))


# ----------------------------------------------------------------------------
# Kernel: one matmul per (row, col, k) step for the concatenated heads,
# accumulating in place into the VMEM-resident f32 output block.
# ----------------------------------------------------------------------------
def _encoder_kernel(x_ref, w_ref, b_ref, out_ref):
    k = pl.program_id(2)

    @pl.when(k == 0)
    def _():
        out_ref[...] = jnp.zeros_like(out_ref)

    out_ref[...] += jnp.dot(x_ref[...], w_ref[...],
                            preferred_element_type=jnp.float32)

    @pl.when(k == pl.num_programs(2) - 1)
    def _():
        out_ref[...] = jnp.maximum(out_ref[...] + b_ref[...], 0.0)


# ----------------------------------------------------------------------------
# One-time parameter preparation (transpose + pad + concat the two heads).
# Do this once at setup, NOT per forward call.
# ----------------------------------------------------------------------------
def prepare_encoder_params(w1, b1, w2, b2, *, tk=512):
    """w1, w2: [nz, nhid] (nn.Linear layout), b1, b2: [nz]."""
    nz, nhid = w1.shape
    tk = min(tk, _round_up(nhid, 128))          # K tile, multiple of 128
    Kp = _round_up(nhid, tk)                    # padded K, multiple of tk
    nz_p = _round_up(nz, 128)                   # per-head padded N

    w1p = _pad2d(w1.T, Kp, nz_p)                # (in, out) layout, zero padded
    w2p = _pad2d(w2.T, Kp, nz_p)
    wc = jnp.concatenate([w1p, w2p], axis=1)    # [Kp, 2*nz_p]

    b1p = _pad2d(b1.reshape(1, nz), 1, nz_p)
    b2p = _pad2d(b2.reshape(1, nz), 1, nz_p)
    bc = jnp.concatenate([b1p, b2p], axis=1)    # [1, 2*nz_p]

    return {"wc": wc, "bc": bc, "nz": nz, "tk": tk}


# ----------------------------------------------------------------------------
# Forward: mu = relu(x @ W1.T + b1), logvar = relu(x @ W2.T + b2)
# ----------------------------------------------------------------------------
def encoder_forward(x, params, *, tm=512, tn=512):
    B, _ = x.shape
    wc, bc = params["wc"], params["bc"]
    nz, tk = params["nz"], params["tk"]
    Kp, Np = wc.shape
    nz_p = Np // 2

    # Row tile (multiple of 8) and padded batch.
    tm = min(_round_up(tm, 8), _round_up(B, 8))
    Bp = _round_up(B, tm)

    # Column tile: multiple of 128 that divides Np (Np is a multiple of 256).
    tn = _round_up(min(tn, Np), 128)
    while Np % tn:
        tn -= 128
    # Megacore (v7x): make sure >=2 parallel grid points when possible.
    if (Bp // tm) * (Np // tn) < 2 and Np >= 256:
        tn = Np // 2            # = nz_p, a multiple of 128 that divides Np

    # Only x is padded per call (zero padding is exact for matmul + bias).
    xp = _pad2d(x, Bp, Kp)

    grid = (Bp // tm, Np // tn, Kp // tk)

    # VMEM footprint: double-buffered x / weight / bias tiles + output block.
    footprint = 2 * 4 * (tm * tk + tk * tn + tn + tm * tn)
    vmem_limit = int(min(max(2 * footprint, 16 << 20), 48 << 20))

    cost = pl.CostEstimate(
        flops=2 * Bp * Kp * Np,
        transcendentals=0,
        bytes_accessed=4 * (Bp * Kp * (Np // tn)       # x re-read per col tile
                            + Kp * Np * (Bp // tm)     # weights per row tile
                            + Bp * Np + Np),           # output + bias
    )

    out = pl.pallas_call(
        _encoder_kernel,
        out_shape=jax.ShapeDtypeStruct((Bp, Np), jnp.float32),
        grid_spec=pltpu.PrefetchScalarGridSpec(
            num_scalar_prefetch=0,
            grid=grid,
            in_specs=[
                pl.BlockSpec((tm, tk), lambda i, j, k: (i, k)),   # x tile
                pl.BlockSpec((tk, tn), lambda i, j, k: (k, j)),   # [W1^T | W2^T]
                pl.BlockSpec((1, tn), lambda i, j, k: (0, j)),    # [b1 | b2]
            ],
            out_specs=pl.BlockSpec((tm, tn), lambda i, j, k: (i, j)),
        ),
        compiler_params=pltpu.CompilerParams(
            dimension_semantics=("parallel", "parallel", "arbitrary"),
            vmem_limit_bytes=vmem_limit,
        ),
        cost_estimate=cost,
    )(xp, wc, bc)

    mu = out[:B, :nz]
    logvar = out[:B, nz_p:nz_p + nz]
    return mu, logvar


# ----------------------------------------------------------------------------
# Self-test against a pure-JAX reference of the PyTorch module.
# ----------------------------------------------------------------------------
def _run_case(key, B, nhid, nz):
    kx, k1, k2, k3, k4 = jax.random.split(key, 5)
    x = jax.random.normal(kx, (B, nhid), jnp.float32)
    w1 = 0.1 * jax.random.normal(k1, (nz, nhid), jnp.float32)
    b1 = 0.1 * jax.random.normal(k2, (nz,), jnp.float32)
    w2 = 0.1 * jax.random.normal(k3, (nz, nhid), jnp.float32)
    b2 = 0.1 * jax.random.normal(k4, (nz,), jnp.float32)

    params = prepare_encoder_params(w1, b1, w2, b2)     # one-time prep
    mu, logvar = encoder_forward(x, params)
    mu, logvar = jax.block_until_ready((mu, logvar))

    mu_ref = jnp.maximum(x @ w1.T + b1, 0.0)
    lv_ref = jnp.maximum(x @ w2.T + b2, 0.0)

    assert mu.shape == (B, nz), mu.shape
    assert logvar.shape == (B, nz), logvar.shape
    assert jnp.allclose(mu, mu_ref, atol=2e-4, rtol=2e-4)
    assert jnp.allclose(logvar, lv_ref, atol=2e-4, rtol=2e-4)


if __name__ == "__main__":
    key = jax.random.PRNGKey(0)
    k_a, k_b, k_c = jax.random.split(key, 3)

    # Module-typical tiny shapes (padded to lane width inside the wrapper).
    _run_case(k_a, B=8, nhid=32, nz=16)
    # Exercises the K-reduction (2 k-steps) and the column split for megacore.
    _run_case(k_b, B=128, nhid=1024, nz=256)
    # Ragged shapes that exercise zero-padding + result slicing.
    _run_case(k_c, B=200, nhid=160, nz=96)

    print("KERNEL_OK")
</pallas_src>

<mosaic_0001>
module attributes {stable_mosaic.version = 11 : i64} {
  func.func @_encoder_kernel(%arg0: i32, %arg1: i32, %arg2: i32, %arg3: memref<8x128xf32, #tpu.memory_space<vmem>>, %arg4: memref<128x128xf32, #tpu.memory_space<vmem>>, %arg5: memref<1x128xf32, #tpu.memory_space<vmem>>, %arg6: memref<8x128xf32, #tpu.memory_space<vmem>>) attributes {dimension_semantics = [#tpu.dimension_semantics<parallel>, #tpu.dimension_semantics<parallel>, #tpu.dimension_semantics<arbitrary>], iteration_bounds = array<i64: 1, 2, 1>, scalar_prefetch = 0 : i64, scratch_operands = 0 : i64, tpu.core_type = #tpu.core_type<tc>, window_params = [{transform_indices = @transform_0, window_bounds = array<i64: 8, 128>}, {transform_indices = @transform_1, window_bounds = array<i64: 128, 128>}, {transform_indices = @transform_2, window_bounds = array<i64: 1, 128>}, {transform_indices = @transform_3, window_bounds = array<i64: 8, 128>}]} {
    %c0_i32 = arith.constant 0 : i32
    %0 = arith.cmpi eq, %arg2, %c0_i32 : i32
    %1 = arith.extui %0 : i1 to i32
    %c0_i32_0 = arith.constant 0 : i32
    %2 = arith.cmpi ne, %1, %c0_i32_0 : i32
    scf.if %2 {
      %cst_10 = arith.constant 0.000000e+00 : f32
      %12 = vector.broadcast %cst_10 : f32 to vector<8x128xf32>
      %c0_11 = arith.constant 0 : index
      %c0_12 = arith.constant 0 : index
      %13 = vector.load %arg6[%c0_11, %c0_12] : memref<8x128xf32, #tpu.memory_space<vmem>>, vector<8x128xf32>
      tpu.vector_store %arg6[%c0_11, %c0_12], %12 {strides = array<i32>} : memref<8x128xf32, #tpu.memory_space<vmem>>, vector<8x128xf32>,
    } else {
    }
    %c0 = arith.constant 0 : index
    %c0_1 = arith.constant 0 : index
    %3 = vector.load %arg6[%c0, %c0_1] : memref<8x128xf32, #tpu.memory_space<vmem>>, vector<8x128xf32>
    %c0_2 = arith.constant 0 : index
    %c0_3 = arith.constant 0 : index
    %4 = vector.load %arg3[%c0_2, %c0_3] : memref<8x128xf32, #tpu.memory_space<vmem>>, vector<8x128xf32>
    %c0_4 = arith.constant 0 : index
    %c0_5 = arith.constant 0 : index
    %5 = vector.load %arg4[%c0_4, %c0_5] : memref<128x128xf32, #tpu.memory_space<vmem>>, vector<128x128xf32>
    %cst = arith.constant dense<0.000000e+00> : vector<8x128xf32>
    %6 = tpu.matmul %4, %5, %cst {dimension_numbers = #tpu.dot_dimension_numbers<[1], [0], [0], [1], [0, 0, 1, 1], [], []>} : vector<8x128xf32>, vector<128x128xf32>, vector<8x128xf32> -> vector<8x128xf32>
    %7 = arith.addf %3, %6 : vector<8x128xf32>
    %c0_6 = arith.constant 0 : index
    %c0_7 = arith.constant 0 : index
    %8 = vector.load %arg6[%c0_6, %c0_7] : memref<8x128xf32, #tpu.memory_space<vmem>>, vector<8x128xf32>
    tpu.vector_store %arg6[%c0_6, %c0_7], %7 {strides = array<i32>} : memref<8x128xf32, #tpu.memory_space<vmem>>, vector<8x128xf32>,
    %c0_i32_8 = arith.constant 0 : i32
    %9 = arith.cmpi eq, %arg2, %c0_i32_8 : i32
    %10 = arith.extui %9 : i1 to i32
    %c0_i32_9 = arith.constant 0 : i32
    %11 = arith.cmpi ne, %10, %c0_i32_9 : i32
    scf.if %11 {
      %c0_10 = arith.constant 0 : index
      %c0_11 = arith.constant 0 : index
      %12 = vector.load %arg6[%c0_10, %c0_11] : memref<8x128xf32, #tpu.memory_space<vmem>>, vector<8x128xf32>
      %c0_12 = arith.constant 0 : index
      %c0_13 = arith.constant 0 : index
      %13 = vector.load %arg5[%c0_12, %c0_13] : memref<1x128xf32, #tpu.memory_space<vmem>>, vector<1x128xf32>
      %14 = vector.broadcast %13 : vector<1x128xf32> to vector<8x128xf32>
      %15 = arith.addf %12, %14 : vector<8x128xf32>
      %cst_14 = arith.constant 0.000000e+00 : f32
      %16 = vector.broadcast %cst_14 : f32 to vector<8x128xf32>
      %17 = arith.maximumf %15, %16 : vector<8x128xf32>
      %c0_15 = arith.constant 0 : index
      %c0_16 = arith.constant 0 : index
      %18 = vector.load %arg6[%c0_15, %c0_16] : memref<8x128xf32, #tpu.memory_space<vmem>>, vector<8x128xf32>
      tpu.vector_store %arg6[%c0_15, %c0_16], %17 {strides = array<i32>} : memref<8x128xf32, #tpu.memory_space<vmem>>, vector<8x128xf32>,
    } else {
    }
    return
  }
  func.func @transform_0(%arg0: i32, %arg1: i32, %arg2: i32) -> (i32, i32) {
    %c0_i32 = arith.constant 0 : i32
    return %arg0, %arg2 : i32, i32
  }
  func.func @transform_1(%arg0: i32, %arg1: i32, %arg2: i32) -> (i32, i32) {
    %c0_i32 = arith.constant 0 : i32
    return %arg2, %arg1 : i32, i32
  }
  func.func @transform_2(%arg0: i32, %arg1: i32, %arg2: i32) -> (i32, i32) {
    %c0_i32 = arith.constant 0 : i32
    %c0_i32_0 = arith.constant 0 : i32
    return %c0_i32, %arg1 : i32, i32
  }
  func.func @transform_3(%arg0: i32, %arg1: i32, %arg2: i32) -> (i32, i32) {
    %c0_i32 = arith.constant 0 : i32
    return %arg0, %arg1 : i32, i32
  }
}

</mosaic_0001>

<llo_original>
// kernel: tpu_custom_call.1
$region0: #{tpu_custom_call.1}
  #allocation0 [shape = 'u32[]', space=smem, size = 0x4, offset = 0x4, fixed_abs, tag = 'smem constant byte address 0x4 - core index']
  #allocation1 [shape = 'u32[144,128]{1,0:T(1,128)}', space=vmem, size = 0x12000, scoped, tag = 'internal scratch']
  %s0 = inlined_call_operand.hbm [shape: f32[8,128], index: 0, kind: input, shape index: {}]
  %s1 = inlined_call_operand.hbm [shape: f32[128,256], index: 1, kind: input, shape index: {}]
  %s2 = inlined_call_operand.vmem [shape: f32[1,256], index: 2, kind: input, shape index: {}]
  %s3 = inlined_call_operand.hbm [shape: f32[8,256], index: 3, kind: output, shape index: {}]
  %s4 = sld [smem:[#allocation0]]
  $region61: #{tpu_custom_call.1} parent=0
    _
  %s6 = ssub.s32 1, %s4
  %s7 = scalar_select 0, %s6, %s4
  $region1: #{tpu_custom_call.1} parent=0
    #allocation2 [shape = 'u8[4096]{0}', space=vmem, size = 0x1000, scoped, tag = 'input window, operand 0, single buffered']
    #allocation3 [shape = 's32[2]{0}', space=sflag, size = 0x8, scoped, tag = 'scoped memory for tpu_custom_call.1']
    #allocation4 [shape = 's32[2]{0}', space=sflag, size = 0x8, scoped, tag = 'scoped memory for tpu_custom_call.1']
    #allocation5 [shape = 'u8[131072]{0}', space=vmem, size = 0x20000, scoped, tag = 'input window, operand 1']
    #allocation6 [shape = 's32[2]{0}', space=sflag, size = 0x8, scoped, tag = 'scoped memory for tpu_custom_call.1']
    #allocation7 [shape = 'u8[8192]{0}', space=vmem, size = 0x2000, scoped, tag = 'output window, operand 0']
    %8 = vsyncpa [#allocation3], 0
    %9 = vsyncpa [#allocation6], 0
    %s10 = scalar_lea.sflag [#allocation6], 1
    %11 = vsyncpa %s10, 0
    %12 = vsyncpa [#allocation4], 0
    %s13 = scalar_lea.sflag [#allocation4], 1
    %14 = vsyncpa %s13, 0
    loop: start=0, step=1, limit=4
    $region2: #{tpu_custom_call.1} parent=1 // loop_pre_header
      _
    $region3: #{tpu_custom_call.1} parent=1 // loop_header
      %s16 = sphi 0, %s20
      %p17 = scmp.ge.s32.totalorder %s16, 4
      %s23 = sphi 0, %s42
      %s24 = sphi 0, %s38
      %s25 = sphi 0, %s34
      %s26 = sphi 0, %s23
      %s27 = sphi 0, %s24
      %s28 = sphi 0, %s25
      %s29 = sphi 0, %s26
      %s30 = sphi 0, %s27
      %s31 = sphi 0, %s28
      %s47 = sphi 0, %s49
      %s50 = sphi 0, %s47
      %s51 = sphi 0, %s50
      %s67 = sphi 0, %s51
      %s75 = sphi 0, %s77
      %s78 = sphi 0, %s75
      %s79 = sphi 0, %s78
      %s95 = sphi 0, %s79
      %s101 = sphi 0, %s103
      %s104 = sphi 0, %s101
      %s105 = sphi 0, %s104
      %s121 = sphi 0, %s105
      %s129 = sphi 0, %s131
      %s132 = sphi 0, %s129
      %s133 = sphi 0, %s132
      %s149 = sphi 0, %s133
    $region4: #{tpu_custom_call.1} parent=1 // loop_header_branch
      %19 = sbr.rel (%p17) target = $region8
    $region5: #{tpu_custom_call.1} parent=1 // loop_body
      %s21 = ssub.s32 %s16, 1
      %s22 = ssub.s32 %s16, 2
      %s32 = sadd.s32 1, %s25
      %p33 = scmp.ge.s32.totalorder %s32, 1
      %s34 = scalar_select %p33, 0, %s32
      %s35 = sadd.s32 1, %s24
      %s36 = scalar_select %p33, %s35, %s24
      %p37 = scmp.ge.s32.totalorder %s36, 2
      %s38 = scalar_select %p37, 0, %s36
      %s39 = sadd.s32 1, %s23
      %s40 = scalar_select %p37, %s39, %s23
      %p41 = scmp.ge.s32.totalorder %s40, 1
      %s42 = scalar_select %p41, 0, %s40
      %s43 = ssub.s32 %s23, %s42
      %s44 = ssub.s32 %s25, %s34
      %s45 = sor.u32 %s43, %s44
      %p46 = scmp.eq.s32.totalorder %s45, 0
      %s48 = sadd.s32 %s47, 1
      %s49 = scalar_select %p46, %s47, %s48
      %p52 = pneg %p46
      %p53 = scmp.eq.s32.totalorder %s16, 1
      %p54 = por %p52, %p53
      %p55 = scmp.ne.s32.totalorder %s47, %s50
      %p56 = scmp.eq.s32.totalorder %s16, 0
      %p57 = por %p55, %p56
      %p58 = scmp.ne.s32.totalorder %s47, %s50
      %p59 = scmp.eq.s32.totalorder %s21, 1
      %p60 = por %p58, %p59
      %p61 = scmp.ne.s32.totalorder %s50, %s51
      %p62 = scmp.eq.s32.totalorder %s21, 0
      %p63 = por %p61, %p62
      %p64 = scmp.ne.s32.totalorder %s50, %s51
      %p65 = scmp.eq.s32.totalorder %s22, 1
      %p66 = por %p64, %p65
      %p68 = scmp.ne.s32.totalorder %s51, %s67
      %p69 = scmp.eq.s32.totalorder %s22, 0
      %p70 = por %p68, %p69
      %s71 = ssub.s32 %s25, %s34
      %s72 = ssub.s32 %s24, %s38
      %s73 = sor.u32 %s71, %s72
      %p74 = scmp.eq.s32.totalorder %s73, 0
      %s76 = sadd.s32 %s75, 1
      %s77 = scalar_select %p74, %s75, %s76
      %p80 = pneg %p74
      %p81 = scmp.eq.s32.totalorder %s16, 1
      %p82 = por %p80, %p81
      %p83 = scmp.ne.s32.totalorder %s75, %s78
      %p84 = scmp.eq.s32.totalorder %s16, 0
      %p85 = por %p83, %p84
      %p86 = scmp.ne.s32.totalorder %s75, %s78
      %p87 = scmp.eq.s32.totalorder %s21, 1
      %p88 = por %p86, %p87
      %p89 = scmp.ne.s32.totalorder %s78, %s79
      %p90 = scmp.eq.s32.totalorder %s21, 0
      %p91 = por %p89, %p90
      %p92 = scmp.ne.s32.totalorder %s78, %s79
      %p93 = scmp.eq.s32.totalorder %s22, 1
      %p94 = por %p92, %p93
      %p96 = scmp.ne.s32.totalorder %s79, %s95
      %p97 = scmp.eq.s32.totalorder %s22, 0
      %p98 = por %p96, %p97
      %s99 = ssub.s32 %s24, %s38
      %p100 = scmp.eq.s32.totalorder %s99, 0
      %s102 = sadd.s32 %s101, 1
      %s103 = scalar_select %p100, %s101, %s102
      %p106 = pneg %p100
      %p107 = scmp.eq.s32.totalorder %s16, 1
      %p108 = por %p106, %p107
      %p109 = scmp.ne.s32.totalorder %s101, %s104
      %p110 = scmp.eq.s32.totalorder %s16, 0
      %p111 = por %p109, %p110
      %p112 = scmp.ne.s32.totalorder %s101, %s104
      %p113 = scmp.eq.s32.totalorder %s21, 1
      %p114 = por %p112, %p113
      %p115 = scmp.ne.s32.totalorder %s104, %s105
      %p116 = scmp.eq.s32.totalorder %s21, 0
      %p117 = por %p115, %p116
      %p118 = scmp.ne.s32.totalorder %s104, %s105
      %p119 = scmp.eq.s32.totalorder %s22, 1
      %p120 = por %p118, %p119
      %p122 = scmp.ne.s32.totalorder %s105, %s121
      %p123 = scmp.eq.s32.totalorder %s22, 0
      %p124 = por %p122, %p123
      %s125 = ssub.s32 %s23, %s42
      %s126 = ssub.s32 %s24, %s38
      %s127 = sor.u32 %s125, %s126
      %p128 = scmp.eq.s32.totalorder %s127, 0
      %s130 = sadd.s32 %s129, 1
      %s131 = scalar_select %p128, %s129, %s130
      %p134 = pneg %p128
      %p135 = scmp.eq.s32.totalorder %s16, 1
      %p136 = por %p134, %p135
      %p137 = scmp.ne.s32.totalorder %s129, %s132
      %p138 = scmp.eq.s32.totalorder %s16, 0
      %p139 = por %p137, %p138
      %p140 = scmp.ne.s32.totalorder %s129, %s132
      %p141 = scmp.eq.s32.totalorder %s21, 1
      %p142 = por %p140, %p141
      %p143 = scmp.ne.s32.totalorder %s132, %s133
      %p144 = scmp.eq.s32.totalorder %s21, 0
      %p145 = por %p143, %p144
      %p146 = scmp.ne.s32.totalorder %s132, %s133
      %p147 = scmp.eq.s32.totalorder %s22, 1
      %p148 = por %p146, %p147
      %p150 = scmp.ne.s32.totalorder %s133, %s149
      %p151 = scmp.eq.s32.totalorder %s22, 0
      %p152 = por %p150, %p151
      %p153 = scmp.le.s32.totalorder 1, %s16
      %p154 = scmp.lt.s32.totalorder %s16, 3
      %p155 = pnand %p153, %p154
      %p156 = pneg %p155
      // Predicated region
      $region9: #{tpu_custom_call.1} parent=5 // pred_check
        _
      $region10: #{tpu_custom_call.1} parent=5 // pred_check_branch
        %158 = sbr.rel (%p155) target = $region12
      $region11: #{tpu_custom_call.1} parent=5 // pred_region
        %s159 = ssub.s32 %s16, 1
        // Predicated region
        $region13: #{tpu_custom_call.1} parent=11 // pred_check
          %p160 = pneg %p63
        $region14: #{tpu_custom_call.1} parent=11 // pred_check_branch
          %162 = sbr.rel (%p160) target = $region16
        $region15: #{tpu_custom_call.1} parent=11 // pred_region
          %s164 = ssub.s32 128, 128
          %165 = vsyncadd [#allocation3], %s164
          %s166 = sadd.s32 %s28, %s26
          %s167 = smul.addr %s166, 128
          %s168 = scalar_lea.hbm %s0, %s167
          %s170 = sshll.u32 [#allocation2], 4
          %s171 = int_to_ptr.vmem [resolvable:$true] %s170
          %173 = dma.hbm_to_vmem [thread:$0]  %s168, 128, %s171, [#allocation3]
        $region16: #{tpu_custom_call.1} parent=11 // pred_fallthru
          _
      $region12: #{tpu_custom_call.1} parent=5 // pred_fallthru
        _
      %p174 = scmp.lt.s32.totalorder %s16, 2
      // Predicated region
      $region17: #{tpu_custom_call.1} parent=5 // pred_check
        %p175 = pneg %p174
      $region18: #{tpu_custom_call.1} parent=5 // pred_check_branch
        %177 = sbr.rel (%p175) target = $region20
      $region19: #{tpu_custom_call.1} parent=5 // pred_region
        // Predicated region
        $region21: #{tpu_custom_call.1} parent=19 // pred_check
          %p178 = pneg %p85
        $region22: #{tpu_custom_call.1} parent=19 // pred_check_branch
          %180 = sbr.rel (%p178) target = $region24
        $region23: #{tpu_custom_call.1} parent=19 // pred_region
          %s181 = sand.u32 %s75, 1
          %s182 = scalar_lea.sflag [#allocation6], %s181
          %s183 = sand.u32 %s75, 1
          %s184 = smul.addr %s183, 128
          %s185 = scalar_lea.vmem [#allocation5], %s184
          %s186 = smul.u32 16, %s25
          %s188 = ssub.s32 2048, 2048
          %189 = vsyncadd %s182, %s188
          %s190 = smul.addr %s186, 2
          %s191 = sadd.s32 %s24, %s190
          %s192 = smul.addr %s191, 128
          %s193 = scalar_lea.hbm %s1, %s192
          %s194 = sshll.u32 %s185, 4
          %s195 = int_to_ptr.vmem [resolvable:$true] %s194
          %200 = dma.hbm_to_vmem [thread:$0]  %s193, 2048, %s195, %s182, 256, 128, 8
        $region24: #{tpu_custom_call.1} parent=19 // pred_fallthru
          _
        // Predicated region
        $region25: #{tpu_custom_call.1} parent=19 // pred_check
          %p201 = pneg %p111
        $region26: #{tpu_custom_call.1} parent=19 // pred_check_branch
          %203 = sbr.rel (%p201) target = $region28
        $region27: #{tpu_custom_call.1} parent=19 // pred_region
          %p204 = scmp.lt.s32.totalorder %s24, 1
          %s205 = scalar_select %p204, %s24, 1
          %s206 = scalar_lea.vmem %s2, %s205
        $region28: #{tpu_custom_call.1} parent=19 // pred_fallthru
          _
      $region20: #{tpu_custom_call.1} parent=5 // pred_fallthru
        _
      %p207 = scmp.le.s32.totalorder 1, %s16
      %p208 = scmp.lt.s32.totalorder %s16, 3
      %p209 = pnand %p207, %p208
      %p210 = pneg %p209
      // Predicated region
      $region29: #{tpu_custom_call.1} parent=5 // pred_check
        _
      $region30: #{tpu_custom_call.1} parent=5 // pred_check_branch
        %212 = sbr.rel (%p209) target = $region32
      $region31: #{tpu_custom_call.1} parent=5 // pred_region
        %s213 = ssub.s32 %s16, 1
        // Predicated region
        $region33: #{tpu_custom_call.1} parent=31 // pred_check
          %p214 = pneg %p63
        $region34: #{tpu_custom_call.1} parent=31 // pred_check_branch
          %216 = sbr.rel (%p214) target = $region36
        $region35: #{tpu_custom_call.1} parent=31 // pred_region
          %217 = dma.done [#allocation3], 128
        $region36: #{tpu_custom_call.1} parent=31 // pred_fallthru
          _
        %s218 = sand.u32 %s78, 1
        %s219 = scalar_lea.sflag [#allocation6], %s218
        %s220 = sand.u32 %s78, 1
        %s221 = smul.addr %s220, 128
        %s222 = scalar_lea.vmem [#allocation5], %s221
        // Predicated region
        $region37: #{tpu_custom_call.1} parent=31 // pred_check
          %p223 = pneg %p91
        $region38: #{tpu_custom_call.1} parent=31 // pred_check_branch
          %225 = sbr.rel (%p223) target = $region40
        $region39: #{tpu_custom_call.1} parent=31 // pred_region
          %226 = dma.done %s219, 2048
        $region40: #{tpu_custom_call.1} parent=31 // pred_fallthru
          _
        %p227 = pneg %p63
        %p228 = pneg %p60
        %s229 = sand.u32 %s78, 1
        %s230 = scalar_lea.sflag [#allocation6], %s229
        %s231 = sand.u32 %s78, 1
        %s232 = smul.addr %s231, 128
        %s233 = scalar_lea.vmem [#allocation5], %s232
        %p234 = pneg %p91
        %p235 = pneg %p88
        %p236 = scmp.lt.s32.totalorder %s27, 1
        %s237 = scalar_select %p236, %s27, 1
        %s238 = scalar_lea.vmem %s2, %s237
        %p239 = pneg %p117
        %p240 = pneg %p114
        %p241 = pneg %p145
        %p242 = pneg %p142
        %s243 = sand.u32 %s132, 1
        %s244 = scalar_lea.sflag [#allocation4], %s243
        %s245 = sand.u32 %s132, 1
        %s246 = smul.addr %s245, 8
        %s247 = scalar_lea.vmem [#allocation7], %s246
        %s248 = smul.u32 16, %s28
        %p249 = scmp.lt.s32.totalorder %s27, 1
        %s250 = scalar_select %p249, %s27, 1
        %s251 = scalar_lea.vmem %s2, %s250
        %p252 = scmp.eq.s32.totalorder %s28, 0
        // Predicated region
        $region41: #{tpu_custom_call.1} parent=31 // pred_check
          %p253 = pneg %p252
        $region42: #{tpu_custom_call.1} parent=31 // pred_check_branch
          %255 = sbr.rel (%p253) target = $region44
        $region43: #{tpu_custom_call.1} parent=31 // pred_region
          %256 = vst [vmem:[%s247] sm:$0xff] 0.0
        $region44: #{tpu_custom_call.1} parent=31 // pred_fallthru
          _
        %v257 = vld [vmem:[%s247] sm:$0xff]
        %v258 = vld [vmem:[#allocation2] sm:$0xff]
        %v259 = vld [vmem:[%s222] sm:$0xff]
        %v260 = vld [vmem:[%s222 + $0x8] sm:$0xff]
        %v261 = vld [vmem:[%s222 + $0x10] sm:$0xff]
        %v262 = vld [vmem:[%s222 + $0x18] sm:$0xff]
        %v263 = vld [vmem:[%s222 + $0x20] sm:$0xff]
        %v264 = vld [vmem:[%s222 + $0x28] sm:$0xff]
        %v265 = vld [vmem:[%s222 + $0x30] sm:$0xff]
        %v266 = vld [vmem:[%s222 + $0x38] sm:$0xff]
        %v267 = vld [vmem:[%s222 + $0x40] sm:$0xff]
        %v268 = vld [vmem:[%s222 + $0x48] sm:$0xff]
        %v269 = vld [vmem:[%s222 + $0x50] sm:$0xff]
        %v270 = vld [vmem:[%s222 + $0x58] sm:$0xff]
        %v271 = vld [vmem:[%s222 + $0x60] sm:$0xff]
        %v272 = vld [vmem:[%s222 + $0x68] sm:$0xff]
        %v273 = vld [vmem:[%s222 + $0x70] sm:$0xff]
        %v274 = vld [vmem:[%s222 + $0x78] sm:$0xff]
        %275 = vmatprep.subr.mxu0 0.0
        %276 = vmatpush1.msra.mxu0 %v259
        %277 = vmatprep.subr.mxu0 0.0
        %278 = vmatpush1.msra.mxu0 %v260
        %279 = vmatprep.subr.mxu0 0.0
        %280 = vmatpush1.msra.mxu0 %v261
        %281 = vmatprep.subr.mxu0 0.0
        %282 = vmatpush1.msra.mxu0 %v262
        %283 = vmatprep.subr.mxu0 0.0
        %284 = vmatpush1.msra.mxu0 %v263
        %285 = vmatprep.subr.mxu0 0.0
        %286 = vmatpush1.msra.mxu0 %v264
        %287 = vmatprep.subr.mxu0 0.0
        %288 = vmatpush1.msra.mxu0 %v265
        %289 = vmatprep.subr.mxu0 0.0
        %290 = vmatpush1.msra.mxu0 %v266
        %291 = vmatprep.subr.mxu0 0.0
        %292 = vmatpush1.msra.mxu0 %v267
        %293 = vmatprep.subr.mxu0 0.0
        %294 = vmatpush1.msra.mxu0 %v268
        %295 = vmatprep.subr.mxu0 0.0
        %296 = vmatpush1.msra.mxu0 %v269
        %297 = vmatprep.subr.mxu0 0.0
        %298 = vmatpush1.msra.mxu0 %v270
        %299 = vmatprep.subr.mxu0 0.0
        %300 = vmatpush1.msra.mxu0 %v271
        %301 = vmatprep.subr.mxu0 0.0
        %302 = vmatpush1.msra.mxu0 %v272
        %303 = vmatprep.subr.mxu0 0.0
        %304 = vmatpush1.msra.mxu0 %v273
        %305 = vmatprep.subr.mxu0 0.0
        %306 = vmatpush1.msra.mxu0 %v274
        %307 = vmatprep.subr.mxu0 0.0
        %308 = vmatpush1.msra.mxu0 0.0
        %309 = vmatprep.subr.mxu0 0.0
        %310 = vmatpush1.msra.mxu0 0.0
        %311 = vmatprep.subr.mxu0 0.0
        %312 = vmatpush1.msra.mxu0 0.0
        %313 = vmatprep.subr.mxu0 0.0
        %314 = vmatpush1.msra.mxu0 0.0
        %315 = vmatprep.subr.mxu0 0.0
        %316 = vmatpush1.msra.mxu0 0.0
        %317 = vmatprep.subr.mxu0 0.0
        %318 = vmatpush1.msra.mxu0 0.0
        %319 = vmatprep.subr.mxu0 0.0
        %320 = vmatpush1.msra.mxu0 0.0
        %321 = vmatprep.subr.mxu0 0.0
        %322 = vmatpush1.msra.mxu0 0.0
        %323 = vmatprep.subr.mxu0 0.0
        %324 = vmatpush1.msra.mxu0 0.0
        %325 = vmatprep.subr.mxu0 0.0
        %326 = vmatpush1.msra.mxu0 0.0
        %327 = vmatprep.subr.mxu0 0.0
        %328 = vmatpush1.msra.mxu0 0.0
        %329 = vmatprep.subr.mxu0 0.0
        %330 = vmatpush1.msra.mxu0 0.0
        %331 = vmatprep.subr.mxu0 0.0
        %332 = vmatpush1.msra.mxu0 0.0
        %333 = vmatprep.subr.mxu0 0.0
        %334 = vmatpush1.msra.mxu0 0.0
        %335 = vmatprep.subr.mxu0 0.0
        %336 = vmatpush1.msra.mxu0 0.0
        %337 = vmatprep.subr.mxu0 0.0
        %338 = vmatpush1.msra.mxu0 0.0
        %339 = vmatprep.mubr.f32.mxu0 0.0
        %340 = vmatmul.mubr.f32.gmra.mrb[0].mxu0 %v258
        %v341 = vpop.f32.mrb[0].mxu0
        %v342 = vadd.f32 0.0, %v341
        %v343 = vpop.f32.mrb[0].mxu0
        %344 = vdwg.mxu0
        %v345 = vadd.f32 %v257, %v342
        %346 = vst [vmem:[%s247] sm:$0xff] %v345
        // Predicated region
        $region45: #{tpu_custom_call.1} parent=31 // pred_check
          %p347 = pneg %p252
        $region46: #{tpu_custom_call.1} parent=31 // pred_check_branch
          %349 = sbr.rel (%p347) target = $region48
        $region47: #{tpu_custom_call.1} parent=31 // pred_region
          %v350 = vld [vmem:[%s247] sm:$0xff]
          %v351 = vld [vmem:[%s251] sm:$0x1]
          %v353 = vlaneseq
          %v354 = vshrl.u32 %v353, 7
          %v355 = vsub.s32 0, %v354
          %v356 = vrot.slane %v351, %v355
          %v358 = vadd.f32 %v350, %v356
          %v359 = vmax.f32 %v358, 0.0
          %360 = vst [vmem:[%s247] sm:$0xff] %v359
        $region48: #{tpu_custom_call.1} parent=31 // pred_fallthru
          _
        %s361 = sand.u32 %s132, 1
        %s362 = scalar_lea.sflag [#allocation4], %s361
        %s363 = sand.u32 %s132, 1
        %s364 = smul.addr %s363, 8
        %s365 = scalar_lea.vmem [#allocation7], %s364
        // Predicated region
        $region49: #{tpu_custom_call.1} parent=31 // pred_check
          %p366 = pneg %p142
        $region50: #{tpu_custom_call.1} parent=31 // pred_check_branch
          %368 = sbr.rel (%p366) target = $region52
        $region51: #{tpu_custom_call.1} parent=31 // pred_region
          %s370 = ssub.s32 128, 128
          %371 = vsyncadd %s362, %s370
          %s372 = smul.addr %s26, 2
          %s373 = sadd.s32 %s27, %s372
          %s374 = smul.addr %s373, 128
          %s375 = scalar_lea.hbm %s3, %s374
          %s377 = sshll.u32 %s365, 4
          %s378 = int_to_ptr.vmem [resolvable:$true] %s377
          %380 = dma.vmem_to_hbm [thread:$0]  %s378, 128, %s375, %s362
        $region52: #{tpu_custom_call.1} parent=31 // pred_fallthru
          _
      $region32: #{tpu_custom_call.1} parent=5 // pred_fallthru
        _
      %p381 = scmp.le.s32.totalorder 2, %s16
      // Predicated region
      $region53: #{tpu_custom_call.1} parent=5 // pred_check
        %p382 = pneg %p381
      $region54: #{tpu_custom_call.1} parent=5 // pred_check_branch
        %384 = sbr.rel (%p382) target = $region56
      $region55: #{tpu_custom_call.1} parent=5 // pred_region
        %s385 = ssub.s32 %s16, 2
        // Predicated region
        $region57: #{tpu_custom_call.1} parent=55 // pred_check
          %p386 = pneg %p148
        $region58: #{tpu_custom_call.1} parent=55 // pred_check_branch
          %388 = sbr.rel (%p386) target = $region60
        $region59: #{tpu_custom_call.1} parent=55 // pred_region
          %s389 = sand.u32 %s133, 1
          %s390 = scalar_lea.sflag [#allocation4], %s389
          %s391 = sand.u32 %s133, 1
          %s392 = smul.addr %s391, 8
          %s393 = scalar_lea.vmem [#allocation7], %s392
          %394 = dma.done %s390, 128
        $region60: #{tpu_custom_call.1} parent=55 // pred_fallthru
          _
      $region56: #{tpu_custom_call.1} parent=5 // pred_fallthru
        _
    $region6: #{tpu_custom_call.1} parent=1 // loop_footer
      %s20 = sadd.s32 1, %s16
    $region7: #{tpu_custom_call.1} parent=1 // loop_footer_branch
      %15 = sbr.rel target = $region3
    $region8: #{tpu_custom_call.1} parent=1 // loop_exit
      _
    %395 = vsyncpa [#allocation3], 1
    %s396 = scalar_lea.sflag [#allocation3], 1
    %397 = vsyncpa %s396, 1
    %398 = vsyncpa [#allocation6], 1
    %s399 = scalar_lea.sflag [#allocation6], 1
    %400 = vsyncpa %s399, 1
    %401 = vsyncpa [#allocation4], 1
    %s402 = scalar_lea.sflag [#allocation4], 1
    %403 = vsyncpa %s402, 1

</llo_original>
